<compile_context>
chip_gen: v7x
topology: tpu7x:2x2x1
jax: 0.10.0
libtpu: 0.0.40
codegen_flags: <defaults>
</compile_context>

<pallas_src>
import functools

import jax
import jax.numpy as jnp
from jax import lax
from jax.experimental import pallas as pl
from jax.experimental.pallas import tpu as pltpu


def _round_up(x, m):
    return ((x + m - 1) // m) * m


def _cdiv(a, b):
    return (a + b - 1) // b


# ---------------------------------------------------------------------------
# Pallas kernel: n_steps of the Taylor-4 (== RK4 for this linear ODE) update on
# the stacked (2D, TILE_R) real/imag state.  One MXU dot per step.
# ---------------------------------------------------------------------------
def _hamevo_kernel(m_ref, s_ref, h_ref, o_ref, *, n_steps, two_d):
    M = m_ref[...]                    # (4*two_d, two_d) = [K; K^2/2; K^3/6; K^4/24]

    # Per-column step size and its powers, kept as (1, TILE_R) rows; the sublane
    # broadcast happens inside each VPU op (no full-width temporaries).
    h1 = h_ref[...]
    h2 = h1 * h1
    h3 = h2 * h1
    h4 = h2 * h2

    def step(_, s):
        # Y = [K s; K^2 s / 2; K^3 s / 6; K^4 s / 24]  — single MXU dot per RK4 step.
        y = jnp.dot(M, s, preferred_element_type=jnp.float32)
        return (s
                + h1 * y[0 * two_d:1 * two_d]
                + h2 * y[1 * two_d:2 * two_d]
                + h3 * y[2 * two_d:3 * two_d]
                + h4 * y[3 * two_d:4 * two_d])

    o_ref[...] = lax.fori_loop(0, n_steps, step, s_ref[...])


# ---------------------------------------------------------------------------
# Tiling plan: VMEM-budget-driven lane tiles; single tile unless forced;
# 2-way megacore split only on dual-TensorCore chips with wide enough tiles.
# ---------------------------------------------------------------------------
_VMEM_BUDGET_BYTES = 12 * 1024 * 1024   # under the default scoped VMEM limit on all gens
_N_BUF = 1                              # blocks are single-buffered (pl.Buffered(1))


def _max_tile_cols(two_d):
    """Widest lane tile (multiple of 128) whose working set fits the VMEM budget."""
    fixed = 4 * two_d * two_d * 4                       # M (resident, single-buffered)
    per_col = 4 * (two_d * _N_BUF                       # state input block
                   + two_d * _N_BUF                     # output block
                   + 4 * two_d                          # Y = M @ s intermediate
                   + 2 * two_d                          # loop carry + update temporaries
                   + 8 * _N_BUF + 8)                    # h rows (sublane-padded) + slack
    cols = max(128, (_VMEM_BUDGET_BYTES - fixed) // per_col)
    return max(128, (cols // 128) * 128)


def _num_tensorcores():
    """Best-effort TensorCore count per device (1 on v5e/v6e, 2 on v4/v5p/v7x)."""
    try:
        dev = jax.devices()[0]
        n = getattr(dev, "num_cores", None)
        if n:
            return int(n)
        kind = str(getattr(dev, "device_kind", "")).lower()
        return 2 if any(v in kind for v in ("v4", "v5p", "v7")) else 1
    except Exception:
        return 1


def _plan_tiles(R, two_d):
    r128 = _round_up(R, 128)
    cap = _max_tile_cols(two_d)
    num_tiles = _cdiv(r128, cap)
    # Megacore split only when there are 2 TCs and each half stays >= 512 lanes wide.
    if num_tiles == 1 and _num_tensorcores() >= 2 and r128 >= 2 * 512:
        num_tiles = 2
    tile_r = _round_up(_cdiv(r128, num_tiles), 128)
    return tile_r, num_tiles, tile_r * num_tiles


# ---------------------------------------------------------------------------
# Wrapper: layout plumbing (permute target qubits to the front, flatten, stack
# real/imag, build the Taylor matrix M, pad R lane-dense, call the kernel)
# ---------------------------------------------------------------------------
def hamevo_forward(state_re, state_im, H_re, H_im, t, qubits, n_qubits, n_steps=100):
    qubits = tuple(qubits)
    k = len(qubits)
    D = 2 ** k
    two_d = 2 * D
    batch = state_re.shape[-1]
    rest_axes = [a for a in range(n_qubits) if a not in qubits]
    n_rest = 2 ** (n_qubits - k)
    R = n_rest * batch

    perm = list(qubits) + rest_axes + [n_qubits]
    inv_perm = [0] * (n_qubits + 1)
    for i, p in enumerate(perm):
        inv_perm[p] = i

    def flatten(s):
        return jnp.transpose(s, perm).reshape(D, R)

    sr = flatten(state_re.astype(jnp.float32))
    si = flatten(state_im.astype(jnp.float32))
    S = jnp.concatenate([sr, si], axis=0)                         # (2D, R) stacked state

    # K encodes k = -i H psi on the stacked real/imag state; M stacks the Taylor
    # polynomial terms so ONE dot per step reproduces RK4 for this linear ODE.
    Hr = H_re.astype(jnp.float32)
    Hi = H_im.astype(jnp.float32)
    K1 = jnp.block([[Hi, Hr], [-Hr, Hi]])                          # (2D, 2D)
    K2 = K1 @ K1
    K3 = K2 @ K1
    K4 = K3 @ K1
    M = jnp.concatenate([K1, K2 / 2.0, K3 / 6.0, K4 / 24.0], axis=0)   # (8D, 2D)

    # Per-column step size h = t / n_steps (varies only with batch, the fastest flat axis).
    h_b = t.astype(jnp.float32) / float(n_steps)                   # (batch,)
    h_row = jnp.broadcast_to(h_b[None, None, :], (1, n_rest, batch)).reshape(1, R)

    tile_r, num_tiles, r_pad = _plan_tiles(R, two_d)
    if r_pad != R:
        S = jnp.pad(S, ((0, 0), (0, r_pad - R)))
        h_row = jnp.pad(h_row, ((0, 0), (0, r_pad - R)))

    kernel = functools.partial(_hamevo_kernel, n_steps=n_steps, two_d=two_d)
    single = pl.Buffered(1)   # 1-2 grid steps: double buffering only wastes VMEM
    out = pl.pallas_call(
        kernel,
        grid=(num_tiles,),
        in_specs=[
            pl.BlockSpec((4 * two_d, two_d), lambda i: (0, 0), pipeline_mode=single),  # M (resident)
            pl.BlockSpec((two_d, tile_r), lambda i: (0, i), pipeline_mode=single),     # state tile
            pl.BlockSpec((1, tile_r), lambda i: (0, i), pipeline_mode=single),         # h row tile
        ],
        out_specs=pl.BlockSpec((two_d, tile_r), lambda i: (0, i), pipeline_mode=single),
        out_shape=jax.ShapeDtypeStruct((two_d, r_pad), jnp.float32),
        input_output_aliases={1: 0},                               # stacked state in -> out
        compiler_params=pltpu.CompilerParams(dimension_semantics=("parallel",)),
    )(M, S, h_row)

    out = out[:, :R]
    out_r, out_i = out[:D], out[D:]

    def unflatten(f):
        return jnp.transpose(f.reshape((2,) * n_qubits + (batch,)), inv_perm)

    return unflatten(out_r), unflatten(out_i)


# ---------------------------------------------------------------------------
# Pure-JAX complex reference (mirrors the torch module's apply(): RK4 steps)
# ---------------------------------------------------------------------------
def hamevo_reference(state_c, H_c, t, qubits, n_qubits, n_steps=100):
    qubits = list(qubits)
    k = len(qubits)
    batch = state_c.shape[-1]
    Hrs = H_c.reshape((2,) * (2 * k))

    def apply_H(s):
        out = jnp.tensordot(Hrs, s, axes=(list(range(k, 2 * k)), qubits))
        return jnp.moveaxis(out, list(range(k)), qubits)

    h = (t.reshape(1, -1) / n_steps).reshape((1,) * n_qubits + (batch,)).astype(state_c.dtype)

    def step(_, s):
        k1 = -1j * apply_H(s)
        k2 = -1j * apply_H(s + h / 2 * k1)
        k3 = -1j * apply_H(s + h / 2 * k2)
        k4 = -1j * apply_H(s + h * k3)
        return s + h / 6 * (k1 + 2 * k2 + 2 * k3 + k4)

    return lax.fori_loop(0, n_steps, step, state_c)


# ---------------------------------------------------------------------------
if __name__ == "__main__":
    n_qubits = 6
    qubits = (0, 1, 2)        # H acts on qubits 0,1,2  ->  D = 8
    n_steps = 100
    batch = 16                # R = 2^(6-3) * 16 = 128 (lane-dense)

    D = 2 ** len(qubits)
    key = jax.random.PRNGKey(0)
    kA, kB, kS1, kS2 = jax.random.split(key, 4)

    # Deterministic Hermitian Hamiltonian H = A + A^dagger
    A_re = jax.random.normal(kA, (D, D), jnp.float32)
    A_im = jax.random.normal(kB, (D, D), jnp.float32)
    H_re = A_re + A_re.T
    H_im = A_im - A_im.T

    # Per-batch evolution times
    t = jnp.linspace(0.05, 0.30, batch).astype(jnp.float32)

    # Random normalized complex input state, shape (2,)*n_qubits + (batch,)
    shape = (2,) * n_qubits + (batch,)
    s_re = jax.random.normal(kS1, shape, jnp.float32)
    s_im = jax.random.normal(kS2, shape, jnp.float32)
    norm = jnp.sqrt(jnp.sum(s_re ** 2 + s_im ** 2, axis=tuple(range(n_qubits)), keepdims=True))
    s_re = s_re / norm
    s_im = s_im / norm

    out_re, out_im = hamevo_forward(s_re, s_im, H_re, H_im, t, qubits, n_qubits, n_steps)
    jax.block_until_ready((out_re, out_im))

    # Correctness check against the complex-valued pure-JAX RK4 reference.
    # (Tolerance allows for the Taylor-4 reassociation and MXU f32 accumulation.)
    state_c = (s_re + 1j * s_im).astype(jnp.complex64)
    H_c = (H_re + 1j * H_im).astype(jnp.complex64)
    ref = jax.block_until_ready(hamevo_reference(state_c, H_c, t, qubits, n_qubits, n_steps))

    assert jnp.allclose(out_re, jnp.real(ref), atol=2e-4, rtol=2e-3), "real part mismatch"
    assert jnp.allclose(out_im, jnp.imag(ref), atol=2e-4, rtol=2e-3), "imag part mismatch"

    print("KERNEL_OK")
</pallas_src>

<mosaic_0001>
module attributes {stable_mosaic.version = 11 : i64} {
  func.func @_hamevo_kernel(%arg0: i32, %arg1: memref<64x16xf32, #tpu.memory_space<vmem>>, %arg2: memref<16x128xf32, #tpu.memory_space<vmem>>, %arg3: memref<1x128xf32, #tpu.memory_space<vmem>>, %arg4: memref<16x128xf32, #tpu.memory_space<vmem>>) attributes {dimension_semantics = [#tpu.dimension_semantics<parallel>], iteration_bounds = array<i64: 1>, scalar_prefetch = 0 : i64, scratch_operands = 0 : i64, tpu.core_type = #tpu.core_type<tc>, window_params = [{pipeline_mode = #tpu.pipeline_mode<synchronous>, transform_indices = @transform_0, window_bounds = array<i64: 64, 16>}, {pipeline_mode = #tpu.pipeline_mode<synchronous>, transform_indices = @transform_1, window_bounds = array<i64: 16, 128>}, {pipeline_mode = #tpu.pipeline_mode<synchronous>, transform_indices = @transform_2, window_bounds = array<i64: 1, 128>}, {pipeline_mode = #tpu.pipeline_mode<synchronous>, transform_indices = @transform_3, window_bounds = array<i64: 16, 128>}]} {
    %c0 = arith.constant 0 : index
    %c0_0 = arith.constant 0 : index
    %0 = vector.load %arg1[%c0, %c0_0] : memref<64x16xf32, #tpu.memory_space<vmem>>, vector<64x16xf32>
    %c0_1 = arith.constant 0 : index
    %c0_2 = arith.constant 0 : index
    %1 = vector.load %arg3[%c0_1, %c0_2] : memref<1x128xf32, #tpu.memory_space<vmem>>, vector<1x128xf32>
    %2 = arith.mulf %1, %1 : vector<1x128xf32>
    %3 = arith.mulf %2, %1 : vector<1x128xf32>
    %4 = arith.mulf %2, %2 : vector<1x128xf32>
    %c0_3 = arith.constant 0 : index
    %c0_4 = arith.constant 0 : index
    %5 = vector.load %arg2[%c0_3, %c0_4] : memref<16x128xf32, #tpu.memory_space<vmem>>, vector<16x128xf32>
    %c0_i32 = arith.constant 0 : i32
    %c100_i32 = arith.constant 100 : i32
    %6 = arith.addi %c0_i32, %c100_i32 : i32
    %c1_i32 = arith.constant 1 : i32
    %7 = scf.for %arg5 = %c0_i32 to %6 step %c1_i32 iter_args(%arg6 = %5) -> (vector<16x128xf32>)  : i32 {
      %cst = arith.constant dense<0.000000e+00> : vector<64x128xf32>
      %9 = tpu.matmul %0, %arg6, %cst {dimension_numbers = #tpu.dot_dimension_numbers<[1], [0], [0], [1], [0, 0, 1, 1], [], []>} : vector<64x16xf32>, vector<16x128xf32>, vector<64x128xf32> -> vector<64x128xf32>
      %10 = vector.extract_strided_slice %9 {offsets = [0, 0], sizes = [16, 128], strides = [1, 1]} : vector<64x128xf32> to vector<16x128xf32>
      %11 = vector.broadcast %1 : vector<1x128xf32> to vector<16x128xf32>
      %12 = arith.mulf %11, %10 : vector<16x128xf32>
      %13 = arith.addf %arg6, %12 : vector<16x128xf32>
      %14 = vector.extract_strided_slice %9 {offsets = [16, 0], sizes = [16, 128], strides = [1, 1]} : vector<64x128xf32> to vector<16x128xf32>
      %15 = vector.broadcast %2 : vector<1x128xf32> to vector<16x128xf32>
      %16 = arith.mulf %15, %14 : vector<16x128xf32>
      %17 = arith.addf %13, %16 : vector<16x128xf32>
      %18 = vector.extract_strided_slice %9 {offsets = [32, 0], sizes = [16, 128], strides = [1, 1]} : vector<64x128xf32> to vector<16x128xf32>
      %19 = vector.broadcast %3 : vector<1x128xf32> to vector<16x128xf32>
      %20 = arith.mulf %19, %18 : vector<16x128xf32>
      %21 = arith.addf %17, %20 : vector<16x128xf32>
      %22 = vector.extract_strided_slice %9 {offsets = [48, 0], sizes = [16, 128], strides = [1, 1]} : vector<64x128xf32> to vector<16x128xf32>
      %23 = vector.broadcast %4 : vector<1x128xf32> to vector<16x128xf32>
      %24 = arith.mulf %23, %22 : vector<16x128xf32>
      %25 = arith.addf %21, %24 : vector<16x128xf32>
      scf.yield %25 : vector<16x128xf32>
    }
    %c0_5 = arith.constant 0 : index
    %c0_6 = arith.constant 0 : index
    %8 = vector.load %arg4[%c0_5, %c0_6] : memref<16x128xf32, #tpu.memory_space<vmem>>, vector<16x128xf32>
    tpu.vector_store %arg4[%c0_5, %c0_6], %7 {strides = array<i32>} : memref<16x128xf32, #tpu.memory_space<vmem>>, vector<16x128xf32>,
    return
  }
  func.func @transform_0(%arg0: i32) -> (i32, i32) {
    %c0_i32 = arith.constant 0 : i32
    %c0_i32_0 = arith.constant 0 : i32
    %c0_i32_1 = arith.constant 0 : i32
    return %c0_i32, %c0_i32_0 : i32, i32
  }
  func.func @transform_1(%arg0: i32) -> (i32, i32) {
    %c0_i32 = arith.constant 0 : i32
    %c0_i32_0 = arith.constant 0 : i32
    return %c0_i32, %arg0 : i32, i32
  }
  func.func @transform_2(%arg0: i32) -> (i32, i32) {
    %c0_i32 = arith.constant 0 : i32
    %c0_i32_0 = arith.constant 0 : i32
    return %c0_i32, %arg0 : i32, i32
  }
  func.func @transform_3(%arg0: i32) -> (i32, i32) {
    %c0_i32 = arith.constant 0 : i32
    %c0_i32_0 = arith.constant 0 : i32
    return %c0_i32, %arg0 : i32, i32
  }
}

</mosaic_0001>

<llo_original>
// kernel: tpu_custom_call.1
$region0: #{tpu_custom_call.1}
  #allocation0 [shape = 'u32[]', space=smem, size = 0x4, offset = 0x4, fixed_abs, tag = 'smem constant byte address 0x4 - core index']
  #allocation1 [shape = 'u32[144,128]{1,0:T(1,128)}', space=vmem, size = 0x12000, scoped, tag = 'internal scratch']
  %s0 = inlined_call_operand.vmem [shape: f32[64,16], index: 0, kind: input, shape index: {}]
  %s1 = inlined_call_operand.hbm [shape: f32[16,128], index: 1, kind: input, shape index: {}, may-alias: {1,3}]
  %s2 = inlined_call_operand.vmem [shape: f32[1,128], index: 2, kind: input, shape index: {}]
  %s3 = inlined_call_operand.hbm [shape: f32[16,128], index: 3, kind: output, shape index: {}, may-alias: {1,3}]
  %s4 = sld [smem:[#allocation0]]
  $region33: #{tpu_custom_call.1} parent=0
    _
  %s6 = ssub.s32 1, %s4
  %s7 = scalar_select 0, %s6, %s4
  $region1: #{tpu_custom_call.1} parent=0
    #allocation2 [shape = 'u8[8192]{0}', space=vmem, size = 0x2000, scoped, tag = 'input window, operand 1, single buffered']
    #allocation3 [shape = 's32[1]{0}', space=sflag, size = 0x4, scoped, tag = 'scoped memory for tpu_custom_call.1']
    #allocation4 [shape = 's32[1]{0}', space=sflag, size = 0x4, scoped, tag = 'scoped memory for tpu_custom_call.1']
    #allocation5 [shape = 'u8[8192]{0}', space=vmem, size = 0x2000, scoped, tag = 'output window, operand 0, single buffered']
    %8 = vsyncpa [#allocation3], 0
    %9 = vsyncpa [#allocation4], 0
    // Predicated region
    $region2: #{tpu_custom_call.1} parent=1 // pred_check
      _
    $region3: #{tpu_custom_call.1} parent=1 // pred_check_branch
      %11 = sbr.rel (0) target = $region5
    $region4: #{tpu_custom_call.1} parent=1 // pred_region
      _
    $region5: #{tpu_custom_call.1} parent=1 // pred_fallthru
      _
    // Predicated region
    $region6: #{tpu_custom_call.1} parent=1 // pred_check
      _
    $region7: #{tpu_custom_call.1} parent=1 // pred_check_branch
      %13 = sbr.rel (0) target = $region9
    $region8: #{tpu_custom_call.1} parent=1 // pred_region
      %s15 = ssub.s32 256, 256
      %16 = vsyncadd [#allocation3], %s15
      %s17 = sshll.u32 [#allocation2], 4
      %s18 = int_to_ptr.vmem [resolvable:$true] %s17
      %23 = dma.hbm_to_vmem [thread:$0]  %s1, 256, %s18, [#allocation3], 128, 128, 8
    $region9: #{tpu_custom_call.1} parent=1 // pred_fallthru
      _
    // Predicated region
    $region10: #{tpu_custom_call.1} parent=1 // pred_check
      _
    $region11: #{tpu_custom_call.1} parent=1 // pred_check_branch
      %25 = sbr.rel (0) target = $region13
    $region12: #{tpu_custom_call.1} parent=1 // pred_region
      _
    $region13: #{tpu_custom_call.1} parent=1 // pred_fallthru
      _
    // Predicated region
    $region14: #{tpu_custom_call.1} parent=1 // pred_check
      _
    $region15: #{tpu_custom_call.1} parent=1 // pred_check_branch
      %27 = sbr.rel (0) target = $region17
    $region16: #{tpu_custom_call.1} parent=1 // pred_region
      %28 = dma.done [#allocation3], 256
    $region17: #{tpu_custom_call.1} parent=1 // pred_fallthru
      _
    %v29 = vld [vmem:[%s0] sm:$0xff]
    %v30 = vld [vmem:[%s0 + $0x8] sm:$0xff]
    %v31 = vld [vmem:[%s0 + $0x10] sm:$0xff]
    %v32 = vld [vmem:[%s0 + $0x18] sm:$0xff]
    %v33 = vld [vmem:[%s0 + $0x20] sm:$0xff]
    %v34 = vld [vmem:[%s0 + $0x28] sm:$0xff]
    %v35 = vld [vmem:[%s0 + $0x30] sm:$0xff]
    %v36 = vld [vmem:[%s0 + $0x38] sm:$0xff]
    %v37 = vld [vmem:[%s2] sm:$0x1]
    %v38 = vmul.f32 %v37, %v37
    %v39 = vmul.f32 %v38, %v37
    %v40 = vmul.f32 %v38, %v38
    %v41 = vld [vmem:[#allocation2] sm:$0xff]
    %v42 = vld [vmem:[#allocation2 + $0x8] sm:$0xff]
    loop: start=0, step=1, limit=100
    $region18: #{tpu_custom_call.1} parent=1 // loop_pre_header
      _
    $region19: #{tpu_custom_call.1} parent=1 // loop_header
      %s44 = sphi 0, %s48
      %p45 = scmp.ge.s32.totalorder %s44, 100
      %v49 = vphi %v41, %v219
      %v50 = vphi %v42, %v220
    $region20: #{tpu_custom_call.1} parent=1 // loop_header_branch
      %47 = sbr.rel (%p45) target = $region24
    $region21: #{tpu_custom_call.1} parent=1 // loop_body
      %vm51 = vcmask 130048
      %v53 = vsel %vm51, %v29, 0
      %v56 = vsel %vm51, %v30, 0
      %v59 = vsel %vm51, %v31, 0
      %v62 = vsel %vm51, %v32, 0
      %v65 = vsel %vm51, %v33, 0
      %v68 = vsel %vm51, %v34, 0
      %v71 = vsel %vm51, %v35, 0
      %v74 = vsel %vm51, %v36, 0
      %76 = vmatprep.subr.mxu0 0.0
      %77 = vmatpush1.msra.mxu0 %v49
      %78 = vmatprep.subr.mxu0 0.0
      %79 = vmatpush1.msra.mxu0 %v50
      %80 = vmatprep.subr.mxu0 0.0
      %81 = vmatpush1.msra.mxu0 0.0
      %82 = vmatprep.subr.mxu0 0.0
      %83 = vmatpush1.msra.mxu0 0.0
      %84 = vmatprep.subr.mxu0 0.0
      %85 = vmatpush1.msra.mxu0 0.0
      %86 = vmatprep.subr.mxu0 0.0
      %87 = vmatpush1.msra.mxu0 0.0
      %88 = vmatprep.subr.mxu0 0.0
      %89 = vmatpush1.msra.mxu0 0.0
      %90 = vmatprep.subr.mxu0 0.0
      %91 = vmatpush1.msra.mxu0 0.0
      %92 = vmatprep.subr.mxu0 0.0
      %93 = vmatpush1.msra.mxu0 0.0
      %94 = vmatprep.subr.mxu0 0.0
      %95 = vmatpush1.msra.mxu0 0.0
      %96 = vmatprep.subr.mxu0 0.0
      %97 = vmatpush1.msra.mxu0 0.0
      %98 = vmatprep.subr.mxu0 0.0
      %99 = vmatpush1.msra.mxu0 0.0
      %100 = vmatprep.subr.mxu0 0.0
      %101 = vmatpush1.msra.mxu0 0.0
      %102 = vmatprep.subr.mxu0 0.0
      %103 = vmatpush1.msra.mxu0 0.0
      %104 = vmatprep.subr.mxu0 0.0
      %105 = vmatpush1.msra.mxu0 0.0
      %106 = vmatprep.subr.mxu0 0.0
      %107 = vmatpush1.msra.mxu0 0.0
      %108 = vmatprep.subr.mxu0 0.0
      %109 = vmatpush1.msra.mxu0 0.0
      %110 = vmatprep.subr.mxu0 0.0
      %111 = vmatpush1.msra.mxu0 0.0
      %112 = vmatprep.subr.mxu0 0.0
      %113 = vmatpush1.msra.mxu0 0.0
      %114 = vmatprep.subr.mxu0 0.0
      %115 = vmatpush1.msra.mxu0 0.0
      %116 = vmatprep.subr.mxu0 0.0
      %117 = vmatpush1.msra.mxu0 0.0
      %118 = vmatprep.subr.mxu0 0.0
      %119 = vmatpush1.msra.mxu0 0.0
      %120 = vmatprep.subr.mxu0 0.0
      %121 = vmatpush1.msra.mxu0 0.0
      %122 = vmatprep.subr.mxu0 0.0
      %123 = vmatpush1.msra.mxu0 0.0
      %124 = vmatprep.subr.mxu0 0.0
      %125 = vmatpush1.msra.mxu0 0.0
      %126 = vmatprep.subr.mxu0 0.0
      %127 = vmatpush1.msra.mxu0 0.0
      %128 = vmatprep.subr.mxu0 0.0
      %129 = vmatpush1.msra.mxu0 0.0
      %130 = vmatprep.subr.mxu0 0.0
      %131 = vmatpush1.msra.mxu0 0.0
      %132 = vmatprep.subr.mxu0 0.0
      %133 = vmatpush1.msra.mxu0 0.0
      %134 = vmatprep.subr.mxu0 0.0
      %135 = vmatpush1.msra.mxu0 0.0
      %136 = vmatprep.subr.mxu0 0.0
      %137 = vmatpush1.msra.mxu0 0.0
      %138 = vmatprep.subr.mxu0 0.0
      %139 = vmatpush1.msra.mxu0 0.0
      %140 = vmatprep.mubr.f32.mxu0 0.0
      %141 = vmatmul.mubr.f32.gmra.mrb[0].mxu0 %v53
      %v142 = vpop.f32.mrb[0].mxu0
      %v143 = vadd.f32 0.0, %v142
      %v144 = vpop.f32.mrb[0].mxu0
      %145 = vmatprep.mubr.f32.mxu0 0.0
      %146 = vmatmul.mubr.f32.gmra.mrb[0].mxu0 %v56
      %v147 = vpop.f32.mrb[0].mxu0
      %v148 = vadd.f32 0.0, %v147
      %v149 = vpop.f32.mrb[0].mxu0
      %150 = vmatprep.mubr.f32.mxu0 0.0
      %151 = vmatmul.mubr.f32.gmra.mrb[0].mxu0 %v59
      %v152 = vpop.f32.mrb[0].mxu0
      %v153 = vadd.f32 0.0, %v152
      %v154 = vpop.f32.mrb[0].mxu0
      %155 = vmatprep.mubr.f32.mxu0 0.0
      %156 = vmatmul.mubr.f32.gmra.mrb[0].mxu0 %v62
      %v157 = vpop.f32.mrb[0].mxu0
      %v158 = vadd.f32 0.0, %v157
      %v159 = vpop.f32.mrb[0].mxu0
      %160 = vmatprep.mubr.f32.mxu0 0.0
      %161 = vmatmul.mubr.f32.gmra.mrb[0].mxu0 %v65
      %v162 = vpop.f32.mrb[0].mxu0
      %v163 = vadd.f32 0.0, %v162
      %v164 = vpop.f32.mrb[0].mxu0
      %165 = vmatprep.mubr.f32.mxu0 0.0
      %166 = vmatmul.mubr.f32.gmra.mrb[0].mxu0 %v68
      %v167 = vpop.f32.mrb[0].mxu0
      %v168 = vadd.f32 0.0, %v167
      %v169 = vpop.f32.mrb[0].mxu0
      %170 = vmatprep.mubr.f32.mxu0 0.0
      %171 = vmatmul.mubr.f32.gmra.mrb[0].mxu0 %v71
      %v172 = vpop.f32.mrb[0].mxu0
      %v173 = vadd.f32 0.0, %v172
      %v174 = vpop.f32.mrb[0].mxu0
      %175 = vmatprep.mubr.f32.mxu0 0.0
      %176 = vmatmul.mubr.f32.gmra.mrb[0].mxu0 %v74
      %v177 = vpop.f32.mrb[0].mxu0
      %v178 = vadd.f32 0.0, %v177
      %v179 = vpop.f32.mrb[0].mxu0
      %180 = vdwg.mxu0
      %v182 = vlaneseq
      %v183 = vshrl.u32 %v182, 7
      %v184 = vsub.s32 0, %v183
      %v185 = vrot.slane %v37, %v184
      %v187 = vmul.f32 %v185, %v143
      %v188 = vmul.f32 %v185, %v148
      %v189 = vadd.f32 %v49, %v187
      %v190 = vadd.f32 %v50, %v188
      %v192 = vlaneseq
      %v193 = vshrl.u32 %v192, 7
      %v194 = vsub.s32 0, %v193
      %v195 = vrot.slane %v38, %v194
      %v197 = vmul.f32 %v195, %v153
      %v198 = vmul.f32 %v195, %v158
      %v199 = vadd.f32 %v189, %v197
      %v200 = vadd.f32 %v190, %v198
      %v202 = vlaneseq
      %v203 = vshrl.u32 %v202, 7
      %v204 = vsub.s32 0, %v203
      %v205 = vrot.slane %v39, %v204
      %v207 = vmul.f32 %v205, %v163
      %v208 = vmul.f32 %v205, %v168
      %v209 = vadd.f32 %v199, %v207
      %v210 = vadd.f32 %v200, %v208
      %v212 = vlaneseq
      %v213 = vshrl.u32 %v212, 7
      %v214 = vsub.s32 0, %v213
      %v215 = vrot.slane %v40, %v214
      %v217 = vmul.f32 %v215, %v173
      %v218 = vmul.f32 %v215, %v178
      %v219 = vadd.f32 %v209, %v217
      %v220 = vadd.f32 %v210, %v218
    $region22: #{tpu_custom_call.1} parent=1 // loop_footer
      %s48 = sadd.s32 1, %s44
    $region23: #{tpu_custom_call.1} parent=1 // loop_footer_branch
      %43 = sbr.rel target = $region19
    $region24: #{tpu_custom_call.1} parent=1 // loop_exit
      _
    %221 = vst [vmem:[#allocation5] sm:$0xff] %v49
    %222 = vst [vmem:[#allocation5 + $0x8] sm:$0xff] %v50
    // Predicated region
    $region25: #{tpu_custom_call.1} parent=1 // pred_check
      _
    $region26: #{tpu_custom_call.1} parent=1 // pred_check_branch
      %224 = sbr.rel (0) target = $region28
    $region27: #{tpu_custom_call.1} parent=1 // pred_region
      %s226 = ssub.s32 256, 256
      %227 = vsyncadd [#allocation4], %s226
      %s228 = sshll.u32 [#allocation5], 4
      %s229 = int_to_ptr.vmem [resolvable:$true] %s228
      %234 = dma.vmem_to_hbm [thread:$0]  %s229, 256, %s3, [#allocation4], 128, 128, 8
    $region28: #{tpu_custom_call.1} parent=1 // pred_fallthru
      _
    // Predicated region
    $region29: #{tpu_custom_call.1} parent=1 // pred_check
      _
    $region30: #{tpu_custom_call.1} parent=1 // pred_check_branch
      %236 = sbr.rel (0) target = $region32
    $region31: #{tpu_custom_call.1} parent=1 // pred_region
      %237 = dma.done [#allocation4], 256
    $region32: #{tpu_custom_call.1} parent=1 // pred_fallthru
      _
    %238 = vsyncpa [#allocation3], 1
    %239 = vsyncpa [#allocation4], 1

</llo_original>
